<compile_context>
chip_gen: v5e
topology: v5e:2x2
jax: 0.10.0
libtpu: 0.0.40
codegen_flags: <defaults>
</compile_context>

<pallas_src>
import functools
import math

import jax
import jax.numpy as jnp
import numpy as np
from jax.experimental import pallas as pl
from jax.experimental.pallas import tpu as pltpu


# ---------------------------------------------------------------------------
# Pallas kernel: fused 5-layer MLP + residual for one tile of points.
# refs:
#   feat_ref : (TN, F)    F = 3*width = 96  fused features [fc0(xd), sin, cos]
#   xin_ref  : (TN, 2)    original coordinates (for the residual)
#   wnc_ref  : (F, H)     fc_no_code weight,  H = 4*width = 128
#   whid_ref : (3, H, H)  stacked fc1, fc2, fc3 weights
#   bias_ref : (4, H)     stacked [b_no_code, b1, b2, b3]
#   w4_ref   : (H, H)     fc4 weight, zero-padded from (H, 2) to (H, H)
#   b4_ref   : (1, H)     fc4 bias, zero-padded
#   out_ref  : (TN, 2)    x + x * mlp(x)
# ---------------------------------------------------------------------------
def _iphi_mlp_kernel(feat_ref, xin_ref, wnc_ref, whid_ref, bias_ref,
                     w4_ref, b4_ref, out_ref):
    f = feat_ref[...]                                                     # (TN, F)
    # fc_no_code (no activation between it and fc1 — matches the module)
    h = jnp.dot(f, wnc_ref[...], preferred_element_type=jnp.float32) + bias_ref[0:1, :]
    # fc1 + tanh
    h = jnp.dot(h, whid_ref[0], preferred_element_type=jnp.float32) + bias_ref[1:2, :]
    h = jnp.tanh(h)
    # fc2 + tanh
    h = jnp.dot(h, whid_ref[1], preferred_element_type=jnp.float32) + bias_ref[2:3, :]
    h = jnp.tanh(h)
    # fc3 + tanh
    h = jnp.dot(h, whid_ref[2], preferred_element_type=jnp.float32) + bias_ref[3:4, :]
    h = jnp.tanh(h)
    # fc4 (lane-dense padded matmul; only first 2 columns are meaningful)
    d = jnp.dot(h, w4_ref[...], preferred_element_type=jnp.float32) + b4_ref[...]
    d = d[:, 0:2]                                                         # (TN, 2)
    xin = xin_ref[...]                                                    # (TN, 2)
    out_ref[...] = xin + xin * d


# ---------------------------------------------------------------------------
# Parameter handling
# ---------------------------------------------------------------------------
def init_params(key, width=32):
    """Linear layers stored as (fan_in, fan_out) matrices (same semantics as nn.Linear)."""
    def linear(k, fin, fout):
        kw, kb = jax.random.split(k)
        bound = 1.0 / math.sqrt(fin)
        w = jax.random.uniform(kw, (fin, fout), jnp.float32, -bound, bound)
        b = jax.random.uniform(kb, (fout,), jnp.float32, -bound, bound)
        return w, b

    ks = jax.random.split(key, 6)
    w0, b0 = linear(ks[0], 4, width)                    # fc0
    wnc, bnc = linear(ks[1], 3 * width, 4 * width)      # fc_no_code
    w1, b1 = linear(ks[2], 4 * width, 4 * width)        # fc1
    w2, b2 = linear(ks[3], 4 * width, 4 * width)        # fc2
    w3, b3 = linear(ks[4], 4 * width, 4 * width)        # fc3
    w4, b4 = linear(ks[5], 4 * width, 2)                # fc4
    return dict(w0=w0, b0=b0, wnc=wnc, bnc=bnc, w1=w1, b1=b1,
                w2=w2, b2=b2, w3=w3, b3=b3, w4=w4, b4=b4)


def pack_params(params):
    """One-time packing of parameters into kernel-ready resident slabs."""
    H = params["w1"].shape[0]                            # 4*width
    whid = jnp.stack([params["w1"], params["w2"], params["w3"]], axis=0)   # (3, H, H)
    bias = jnp.stack([params["bnc"], params["b1"], params["b2"], params["b3"]], axis=0)
    w4p = jnp.zeros((H, H), jnp.float32).at[:, :2].set(params["w4"])       # lane-dense fc4
    b4p = jnp.zeros((1, H), jnp.float32).at[0, :2].set(params["b4"])
    return dict(w0=params["w0"], b0=params["b0"], wnc=params["wnc"],
                whid=whid, bias=bias, w4p=w4p, b4p=b4p)


# ---------------------------------------------------------------------------
# Forward (code=None path of IPHI.forward)
# ---------------------------------------------------------------------------
def iphi_forward(x, packed, *, tile_n=None, interpret=False):
    """x: float32 (b, n, 2). Returns float32 (b, n, 2)."""
    b, n, _ = x.shape
    wnc, whid, bias = packed["wnc"], packed["whid"], packed["bias"]
    w4p, b4p = packed["w4p"], packed["b4p"]
    F, H = wnc.shape                     # 96, 128
    width = packed["w0"].shape[1]        # 32

    # --- featurization in XLA (elementwise + tiny 4->32 matmul) ---
    x = x.astype(jnp.float32)
    cx = cy = 1e-4
    x0, x1 = x[..., 0], x[..., 1]
    angle = jnp.arctan2(x1 - cy, x0 - cx)
    radius = jnp.sqrt((x0 - cx) ** 2 + (x1 - cy) ** 2)
    xd = jnp.stack([x0, x1, angle, radius], axis=-1)                        # (b,n,4)
    freqs = jnp.pi * (2.0 ** jnp.arange(width // 4, dtype=jnp.float32))     # (width//4,)
    arg = xd[..., :, None] * freqs                                          # (b,n,4,width//4)
    x_sin = jnp.sin(arg).reshape(b, n, width)
    x_cos = jnp.cos(arg).reshape(b, n, width)
    h0 = jnp.dot(xd, packed["w0"], precision=jax.lax.Precision.HIGHEST) + packed["b0"]
    feat = jnp.concatenate([h0, x_sin, x_cos], axis=-1)                     # (b,n,3*width)

    # --- flatten points and pad to a multiple of the tile size ---
    N = b * n
    feat2 = feat.reshape(N, F)
    xin2 = x.reshape(N, 2)
    if tile_n is None:
        tile_n = 128 if N <= 1024 else 512
    n_tiles = (N + tile_n - 1) // tile_n
    Npad = n_tiles * tile_n
    if Npad != N:
        feat2 = jnp.pad(feat2, ((0, Npad - N), (0, 0)))
        xin2 = jnp.pad(xin2, ((0, Npad - N), (0, 0)))

    flops = 2 * Npad * (F * H + 4 * H * H)
    transcendentals = 3 * Npad * H
    bytes_accessed = 4 * (Npad * (F + 2 + 2) + F * H + 4 * H * H + 4 * H + H)

    out = pl.pallas_call(
        _iphi_mlp_kernel,
        out_shape=jax.ShapeDtypeStruct((Npad, 2), jnp.float32),
        grid=(n_tiles,),
        in_specs=[
            pl.BlockSpec((tile_n, F), lambda i: (i, 0)),      # features (tiled)
            pl.BlockSpec((tile_n, 2), lambda i: (i, 0)),      # coords   (tiled)
            pl.BlockSpec((F, H), lambda i: (0, 0)),           # fc_no_code weight (resident)
            pl.BlockSpec((3, H, H), lambda i: (0, 0, 0)),     # fc1/2/3 weights   (resident)
            pl.BlockSpec((4, H), lambda i: (0, 0)),           # biases            (resident)
            pl.BlockSpec((H, H), lambda i: (0, 0)),           # fc4 weight padded (resident)
            pl.BlockSpec((1, H), lambda i: (0, 0)),           # fc4 bias padded   (resident)
        ],
        out_specs=pl.BlockSpec((tile_n, 2), lambda i: (i, 0)),
        compiler_params=pltpu.CompilerParams(
            dimension_semantics=("parallel",),
        ),
        cost_estimate=pl.CostEstimate(
            flops=flops, transcendentals=transcendentals,
            bytes_accessed=bytes_accessed),
        interpret=interpret,
    )(feat2, xin2, wnc, whid, bias, w4p, b4p)

    return out[:N].reshape(b, n, 2)


# ---------------------------------------------------------------------------
# Pure-JAX reference of IPHI.forward (code=None), high precision.
# ---------------------------------------------------------------------------
def iphi_reference(x, params):
    width = params["w0"].shape[1]
    hp = jax.lax.Precision.HIGHEST
    x = x.astype(jnp.float32)
    x0, x1 = x[..., 0], x[..., 1]
    angle = jnp.arctan2(x1 - 1e-4, x0 - 1e-4)
    radius = jnp.sqrt((x0 - 1e-4) ** 2 + (x1 - 1e-4) ** 2)
    xd = jnp.stack([x0, x1, angle, radius], axis=-1)
    b, n, d = xd.shape
    freqs = jnp.pi * (2.0 ** jnp.arange(width // 4, dtype=jnp.float32))
    x_sin = jnp.sin(xd[..., None] * freqs).reshape(b, n, d * width // 4)
    x_cos = jnp.cos(xd[..., None] * freqs).reshape(b, n, d * width // 4)
    h = jnp.dot(xd, params["w0"], precision=hp) + params["b0"]
    h = jnp.concatenate([h, x_sin, x_cos], axis=-1)
    h = jnp.dot(h, params["wnc"], precision=hp) + params["bnc"]
    h = jnp.dot(h, params["w1"], precision=hp) + params["b1"]
    h = jnp.tanh(h)
    h = jnp.dot(h, params["w2"], precision=hp) + params["b2"]
    h = jnp.tanh(h)
    h = jnp.dot(h, params["w3"], precision=hp) + params["b3"]
    h = jnp.tanh(h)
    dd = jnp.dot(h, params["w4"], precision=hp) + params["b4"]
    return x + x * dd


if __name__ == "__main__":
    # Small shapes consistent with the module: batch=2, n_points=64, width=32.
    B, n_pts, width = 2, 64, 32

    key = jax.random.PRNGKey(0)
    k_x, k_p = jax.random.split(key)
    x = jax.random.uniform(k_x, (B, n_pts, 2), dtype=jnp.float32)
    params = init_params(k_p, width=width)
    packed = pack_params(params)

    fwd = jax.jit(functools.partial(iphi_forward, packed=packed))
    out = jax.block_until_ready(fwd(x))

    ref = iphi_reference(x, params)
    assert out.shape == (B, n_pts, 2)
    np.testing.assert_allclose(np.asarray(out), np.asarray(ref),
                               rtol=1e-3, atol=1e-5)
    print("KERNEL_OK")
</pallas_src>

<mosaic_0001>
module attributes {stable_mosaic.version = 11 : i64} {
  func.func @_iphi_mlp_kernel(%arg0: i32, %arg1: memref<128x96xf32, #tpu.memory_space<vmem>>, %arg2: memref<128x2xf32, #tpu.memory_space<vmem>>, %arg3: memref<96x128xf32, #tpu.memory_space<vmem>>, %arg4: memref<3x128x128xf32, #tpu.memory_space<vmem>>, %arg5: memref<4x128xf32, #tpu.memory_space<vmem>>, %arg6: memref<128x128xf32, #tpu.memory_space<vmem>>, %arg7: memref<1x128xf32, #tpu.memory_space<vmem>>, %arg8: memref<128x2xf32, #tpu.memory_space<vmem>>) attributes {dimension_semantics = [#tpu.dimension_semantics<parallel>], iteration_bounds = array<i64: 1>, scalar_prefetch = 0 : i64, scratch_operands = 0 : i64, tpu.core_type = #tpu.core_type<tc>, window_params = [{transform_indices = @transform_0, window_bounds = array<i64: 128, 96>}, {transform_indices = @transform_1, window_bounds = array<i64: 128, 2>}, {pipeline_mode = #tpu.pipeline_mode<synchronous>, transform_indices = @transform_2, window_bounds = array<i64: 96, 128>}, {pipeline_mode = #tpu.pipeline_mode<synchronous>, transform_indices = @transform_3, window_bounds = array<i64: 3, 128, 128>}, {pipeline_mode = #tpu.pipeline_mode<synchronous>, transform_indices = @transform_4, window_bounds = array<i64: 4, 128>}, {pipeline_mode = #tpu.pipeline_mode<synchronous>, transform_indices = @transform_5, window_bounds = array<i64: 128, 128>}, {pipeline_mode = #tpu.pipeline_mode<synchronous>, transform_indices = @transform_6, window_bounds = array<i64: 1, 128>}, {transform_indices = @transform_7, window_bounds = array<i64: 128, 2>}]} {
    %c0 = arith.constant 0 : index
    %c0_0 = arith.constant 0 : index
    %0 = vector.load %arg1[%c0, %c0_0] : memref<128x96xf32, #tpu.memory_space<vmem>>, vector<128x96xf32>
    %c0_1 = arith.constant 0 : index
    %c0_2 = arith.constant 0 : index
    %1 = vector.load %arg3[%c0_1, %c0_2] : memref<96x128xf32, #tpu.memory_space<vmem>>, vector<96x128xf32>
    %cst = arith.constant dense<0.000000e+00> : vector<128x128xf32>
    %2 = tpu.matmul %0, %1, %cst {dimension_numbers = #tpu.dot_dimension_numbers<[1], [0], [0], [1], [0, 0, 1, 1], [], []>} : vector<128x96xf32>, vector<96x128xf32>, vector<128x128xf32> -> vector<128x128xf32>
    %c0_3 = arith.constant 0 : index
    %c0_4 = arith.constant 0 : index
    %3 = vector.load %arg5[%c0_3, %c0_4] : memref<4x128xf32, #tpu.memory_space<vmem>>, vector<1x128xf32>
    %4 = vector.broadcast %3 : vector<1x128xf32> to vector<128x128xf32>
    %5 = arith.addf %2, %4 : vector<128x128xf32>
    %c0_5 = arith.constant 0 : index
    %c0_6 = arith.constant 0 : index
    %c0_7 = arith.constant 0 : index
    %6 = vector.load %arg4[%c0_5, %c0_6, %c0_7] : memref<3x128x128xf32, #tpu.memory_space<vmem>>, vector<1x128x128xf32>
    %7 = vector.shape_cast %6 : vector<1x128x128xf32> to vector<128x128xf32>
    %cst_8 = arith.constant dense<0.000000e+00> : vector<128x128xf32>
    %8 = tpu.matmul %5, %7, %cst_8 {dimension_numbers = #tpu.dot_dimension_numbers<[1], [0], [0], [1], [0, 0, 1, 1], [], []>} : vector<128x128xf32>, vector<128x128xf32>, vector<128x128xf32> -> vector<128x128xf32>
    %c1 = arith.constant 1 : index
    %c0_9 = arith.constant 0 : index
    %9 = vector.load %arg5[%c1, %c0_9] : memref<4x128xf32, #tpu.memory_space<vmem>>, vector<1x128xf32>
    %10 = vector.broadcast %9 : vector<1x128xf32> to vector<128x128xf32>
    %11 = arith.addf %8, %10 : vector<128x128xf32>
    %12 = math.tanh %11 : vector<128x128xf32>
    %c1_10 = arith.constant 1 : index
    %c0_11 = arith.constant 0 : index
    %c0_12 = arith.constant 0 : index
    %13 = vector.load %arg4[%c1_10, %c0_11, %c0_12] : memref<3x128x128xf32, #tpu.memory_space<vmem>>, vector<1x128x128xf32>
    %14 = vector.shape_cast %13 : vector<1x128x128xf32> to vector<128x128xf32>
    %cst_13 = arith.constant dense<0.000000e+00> : vector<128x128xf32>
    %15 = tpu.matmul %12, %14, %cst_13 {dimension_numbers = #tpu.dot_dimension_numbers<[1], [0], [0], [1], [0, 0, 1, 1], [], []>} : vector<128x128xf32>, vector<128x128xf32>, vector<128x128xf32> -> vector<128x128xf32>
    %c2 = arith.constant 2 : index
    %c0_14 = arith.constant 0 : index
    %16 = vector.load %arg5[%c2, %c0_14] : memref<4x128xf32, #tpu.memory_space<vmem>>, vector<1x128xf32>
    %17 = vector.broadcast %16 : vector<1x128xf32> to vector<128x128xf32>
    %18 = arith.addf %15, %17 : vector<128x128xf32>
    %19 = math.tanh %18 : vector<128x128xf32>
    %c2_15 = arith.constant 2 : index
    %c0_16 = arith.constant 0 : index
    %c0_17 = arith.constant 0 : index
    %20 = vector.load %arg4[%c2_15, %c0_16, %c0_17] : memref<3x128x128xf32, #tpu.memory_space<vmem>>, vector<1x128x128xf32>
    %21 = vector.shape_cast %20 : vector<1x128x128xf32> to vector<128x128xf32>
    %cst_18 = arith.constant dense<0.000000e+00> : vector<128x128xf32>
    %22 = tpu.matmul %19, %21, %cst_18 {dimension_numbers = #tpu.dot_dimension_numbers<[1], [0], [0], [1], [0, 0, 1, 1], [], []>} : vector<128x128xf32>, vector<128x128xf32>, vector<128x128xf32> -> vector<128x128xf32>
    %c3 = arith.constant 3 : index
    %c0_19 = arith.constant 0 : index
    %23 = vector.load %arg5[%c3, %c0_19] : memref<4x128xf32, #tpu.memory_space<vmem>>, vector<1x128xf32>
    %24 = vector.broadcast %23 : vector<1x128xf32> to vector<128x128xf32>
    %25 = arith.addf %22, %24 : vector<128x128xf32>
    %26 = math.tanh %25 : vector<128x128xf32>
    %c0_20 = arith.constant 0 : index
    %c0_21 = arith.constant 0 : index
    %27 = vector.load %arg6[%c0_20, %c0_21] : memref<128x128xf32, #tpu.memory_space<vmem>>, vector<128x128xf32>
    %cst_22 = arith.constant dense<0.000000e+00> : vector<128x128xf32>
    %28 = tpu.matmul %26, %27, %cst_22 {dimension_numbers = #tpu.dot_dimension_numbers<[1], [0], [0], [1], [0, 0, 1, 1], [], []>} : vector<128x128xf32>, vector<128x128xf32>, vector<128x128xf32> -> vector<128x128xf32>
    %c0_23 = arith.constant 0 : index
    %c0_24 = arith.constant 0 : index
    %29 = vector.load %arg7[%c0_23, %c0_24] : memref<1x128xf32, #tpu.memory_space<vmem>>, vector<1x128xf32>
    %30 = vector.broadcast %29 : vector<1x128xf32> to vector<128x128xf32>
    %31 = arith.addf %28, %30 : vector<128x128xf32>
    %32 = vector.extract_strided_slice %31 {offsets = [0, 0], sizes = [128, 2], strides = [1, 1]} : vector<128x128xf32> to vector<128x2xf32>
    %c0_25 = arith.constant 0 : index
    %c0_26 = arith.constant 0 : index
    %33 = vector.load %arg2[%c0_25, %c0_26] : memref<128x2xf32, #tpu.memory_space<vmem>>, vector<128x2xf32>
    %34 = arith.mulf %33, %32 : vector<128x2xf32>
    %35 = arith.addf %33, %34 : vector<128x2xf32>
    %c0_27 = arith.constant 0 : index
    %c0_28 = arith.constant 0 : index
    %36 = vector.load %arg8[%c0_27, %c0_28] : memref<128x2xf32, #tpu.memory_space<vmem>>, vector<128x2xf32>
    tpu.vector_store %arg8[%c0_27, %c0_28], %35 {strides = array<i32>} : memref<128x2xf32, #tpu.memory_space<vmem>>, vector<128x2xf32>,
    return
  }
  func.func @transform_0(%arg0: i32) -> (i32, i32) {
    %c0_i32 = arith.constant 0 : i32
    %c0_i32_0 = arith.constant 0 : i32
    return %arg0, %c0_i32 : i32, i32
  }
  func.func @transform_1(%arg0: i32) -> (i32, i32) {
    %c0_i32 = arith.constant 0 : i32
    %c0_i32_0 = arith.constant 0 : i32
    return %arg0, %c0_i32 : i32, i32
  }
  func.func @transform_2(%arg0: i32) -> (i32, i32) {
    %c0_i32 = arith.constant 0 : i32
    %c0_i32_0 = arith.constant 0 : i32
    %c0_i32_1 = arith.constant 0 : i32
    return %c0_i32, %c0_i32_0 : i32, i32
  }
  func.func @transform_3(%arg0: i32) -> (i32, i32, i32) {
    %c0_i32 = arith.constant 0 : i32
    %c0_i32_0 = arith.constant 0 : i32
    %c0_i32_1 = arith.constant 0 : i32
    %c0_i32_2 = arith.constant 0 : i32
    return %c0_i32, %c0_i32_0, %c0_i32_1 : i32, i32, i32
  }
  func.func @transform_4(%arg0: i32) -> (i32, i32) {
    %c0_i32 = arith.constant 0 : i32
    %c0_i32_0 = arith.constant 0 : i32
    %c0_i32_1 = arith.constant 0 : i32
    return %c0_i32, %c0_i32_0 : i32, i32
  }
  func.func @transform_5(%arg0: i32) -> (i32, i32) {
    %c0_i32 = arith.constant 0 : i32
    %c0_i32_0 = arith.constant 0 : i32
    %c0_i32_1 = arith.constant 0 : i32
    return %c0_i32, %c0_i32_0 : i32, i32
  }
  func.func @transform_6(%arg0: i32) -> (i32, i32) {
    %c0_i32 = arith.constant 0 : i32
    %c0_i32_0 = arith.constant 0 : i32
    %c0_i32_1 = arith.constant 0 : i32
    return %c0_i32, %c0_i32_0 : i32, i32
  }
  func.func @transform_7(%arg0: i32) -> (i32, i32) {
    %c0_i32 = arith.constant 0 : i32
    %c0_i32_0 = arith.constant 0 : i32
    return %arg0, %c0_i32 : i32, i32
  }
}

</mosaic_0001>

<llo_original>
// kernel: iphi_forward.1
$region0: #{iphi_forward.1}
  #allocation0 [shape = 'u32[]', space=smem, size = 0x4, offset = 0x4, fixed_abs, tag = 'smem constant byte address 0x4 - core index']
  #allocation1 [shape = 'u32[72,128]{1,0:T(1,128)}', space=vmem, size = 0x9000, scoped, tag = 'internal scratch']
  %s0 = inlined_call_operand.vmem [shape: f32[128,96], index: 0, kind: input, shape index: {}]
  %s1 = inlined_call_operand.vmem [shape: f32[128,2], index: 1, kind: input, shape index: {}]
  %s2 = inlined_call_operand.vmem [shape: f32[96,128], index: 2, kind: input, shape index: {}]
  %s3 = inlined_call_operand.vmem [shape: f32[3,128,128], index: 3, kind: input, shape index: {}]
  %s4 = inlined_call_operand.vmem [shape: f32[4,128], index: 4, kind: input, shape index: {}]
  %s5 = inlined_call_operand.vmem [shape: f32[128,128], index: 5, kind: input, shape index: {}]
  %s6 = inlined_call_operand.vmem [shape: f32[1,128], index: 6, kind: input, shape index: {}]
  %s7 = inlined_call_operand.vmem [shape: f32[128,2], index: 7, kind: output, shape index: {}]
  %s8 = sld [smem:[#allocation0]]
  $region38: #{iphi_forward.1} parent=0
    _
  %s10 = ssub.s32 1, %s8
  %s11 = scalar_select 0, %s10, %s8
  // Predicated region
  $region2: #{iphi_forward.1} parent=0 // pred_check
    _
  $region3: #{iphi_forward.1} parent=0 // pred_check_branch
    %13 = sbr.rel (0) target = $region5
  $region4: #{iphi_forward.1} parent=0 // pred_region
    _
  $region5: #{iphi_forward.1} parent=0 // pred_fallthru
    _
  // Predicated region
  $region6: #{iphi_forward.1} parent=0 // pred_check
    _
  $region7: #{iphi_forward.1} parent=0 // pred_check_branch
    %15 = sbr.rel (0) target = $region9
  $region8: #{iphi_forward.1} parent=0 // pred_region
    _
  $region9: #{iphi_forward.1} parent=0 // pred_fallthru
    _
  // Predicated region
  $region10: #{iphi_forward.1} parent=0 // pred_check
    _
  $region11: #{iphi_forward.1} parent=0 // pred_check_branch
    %17 = sbr.rel (0) target = $region13
  $region12: #{iphi_forward.1} parent=0 // pred_region
    _
  $region13: #{iphi_forward.1} parent=0 // pred_fallthru
    _
  // Predicated region
  $region14: #{iphi_forward.1} parent=0 // pred_check
    _
  $region15: #{iphi_forward.1} parent=0 // pred_check_branch
    %19 = sbr.rel (0) target = $region17
  $region16: #{iphi_forward.1} parent=0 // pred_region
    _
  $region17: #{iphi_forward.1} parent=0 // pred_fallthru
    _
  // Predicated region
  $region18: #{iphi_forward.1} parent=0 // pred_check
    _
  $region19: #{iphi_forward.1} parent=0 // pred_check_branch
    %21 = sbr.rel (0) target = $region21
  $region20: #{iphi_forward.1} parent=0 // pred_region
    _
  $region21: #{iphi_forward.1} parent=0 // pred_fallthru
    _
  // Predicated region
  $region22: #{iphi_forward.1} parent=0 // pred_check
    _
  $region23: #{iphi_forward.1} parent=0 // pred_check_branch
    %23 = sbr.rel (0) target = $region25
  $region24: #{iphi_forward.1} parent=0 // pred_region
    _
  $region25: #{iphi_forward.1} parent=0 // pred_fallthru
    _
  // Predicated region
  $region26: #{iphi_forward.1} parent=0 // pred_check
    _
  $region27: #{iphi_forward.1} parent=0 // pred_check_branch
    %25 = sbr.rel (0) target = $region29
  $region28: #{iphi_forward.1} parent=0 // pred_region
    _
  $region29: #{iphi_forward.1} parent=0 // pred_fallthru
    _
  %v26 = vld [vmem:[%s0] sm:$0xff]
  %v27 = vld [vmem:[%s0 + $0x8] sm:$0xff]
  %v28 = vld [vmem:[%s0 + $0x10] sm:$0xff]
  %v29 = vld [vmem:[%s0 + $0x18] sm:$0xff]
  %v30 = vld [vmem:[%s0 + $0x20] sm:$0xff]
  %v31 = vld [vmem:[%s0 + $0x28] sm:$0xff]
  %v32 = vld [vmem:[%s0 + $0x30] sm:$0xff]
  %v33 = vld [vmem:[%s0 + $0x38] sm:$0xff]
  %v34 = vld [vmem:[%s0 + $0x40] sm:$0xff]
  %v35 = vld [vmem:[%s0 + $0x48] sm:$0xff]
  %v36 = vld [vmem:[%s0 + $0x50] sm:$0xff]
  %v37 = vld [vmem:[%s0 + $0x58] sm:$0xff]
  %v38 = vld [vmem:[%s0 + $0x60] sm:$0xff]
  %v39 = vld [vmem:[%s0 + $0x68] sm:$0xff]
  %v40 = vld [vmem:[%s0 + $0x70] sm:$0xff]
  %v41 = vld [vmem:[%s0 + $0x78] sm:$0xff]
  %v42 = vld [vmem:[%s2] sm:$0xff]
  %v43 = vld [vmem:[%s2 + $0x8] sm:$0xff]
  %v44 = vld [vmem:[%s2 + $0x10] sm:$0xff]
  %v45 = vld [vmem:[%s2 + $0x18] sm:$0xff]
  %v46 = vld [vmem:[%s2 + $0x20] sm:$0xff]
  %v47 = vld [vmem:[%s2 + $0x28] sm:$0xff]
  %v48 = vld [vmem:[%s2 + $0x30] sm:$0xff]
  %v49 = vld [vmem:[%s2 + $0x38] sm:$0xff]
  %v50 = vld [vmem:[%s2 + $0x40] sm:$0xff]
  %v51 = vld [vmem:[%s2 + $0x48] sm:$0xff]
  %v52 = vld [vmem:[%s2 + $0x50] sm:$0xff]
  %v53 = vld [vmem:[%s2 + $0x58] sm:$0xff]
  %v54 = vld [vmem:[%s4] sm:$0x1]
  %v55 = vperm.slane %v54, 0
  %vm56 = vcmask 785408
  %v58 = vsel %vm56, %v26, 0
  %v61 = vsel %vm56, %v27, 0
  %v64 = vsel %vm56, %v28, 0
  %v67 = vsel %vm56, %v29, 0
  %v70 = vsel %vm56, %v30, 0
  %v73 = vsel %vm56, %v31, 0
  %v76 = vsel %vm56, %v32, 0
  %v79 = vsel %vm56, %v33, 0
  %v82 = vsel %vm56, %v34, 0
  %v85 = vsel %vm56, %v35, 0
  %v88 = vsel %vm56, %v36, 0
  %v91 = vsel %vm56, %v37, 0
  %v94 = vsel %vm56, %v38, 0
  %v97 = vsel %vm56, %v39, 0
  %v100 = vsel %vm56, %v40, 0
  %v103 = vsel %vm56, %v41, 0
  %105 = vmatpush.msra.mxu0 0.0
  %106 = vmatpush.msra.mxu0 0.0
  %107 = vmatpush.msra.mxu0 0.0
  %108 = vmatpush.msra.mxu0 0.0
  %109 = vmatpush.msra.mxu0 %v53
  %110 = vmatpush.msra.mxu0 %v52
  %111 = vmatpush.msra.mxu0 %v51
  %112 = vmatpush.msra.mxu0 %v50
  %113 = vmatpush.msra.mxu0 %v49
  %114 = vmatpush.msra.mxu0 %v48
  %115 = vmatpush.msra.mxu0 %v47
  %116 = vmatpush.msra.mxu0 %v46
  %117 = vmatpush.msra.mxu0 %v45
  %118 = vmatpush.msra.mxu0 %v44
  %119 = vmatpush.msra.mxu0 %v43
  %120 = vmatpush.msra.mxu0 %v42
  %121 = vmatmul.f32.gmra.mxu0 %v58
  %v122 = vpop.f32.mrf.mxu0
  %v123 = vadd.f32 %v55, %v122
  %124 = vmatmul.f32.gmra.mxu0 %v61
  %v125 = vpop.f32.mrf.mxu0
  %v126 = vadd.f32 %v55, %v125
  %127 = vmatmul.f32.gmra.mxu0 %v64
  %v128 = vpop.f32.mrf.mxu0
  %v129 = vadd.f32 %v55, %v128
  %130 = vmatmul.f32.gmra.mxu0 %v67
  %v131 = vpop.f32.mrf.mxu0
  %v132 = vadd.f32 %v55, %v131
  %133 = vmatmul.f32.gmra.mxu0 %v70
  %v134 = vpop.f32.mrf.mxu0
  %v135 = vadd.f32 %v55, %v134
  %136 = vmatmul.f32.gmra.mxu0 %v73
  %v137 = vpop.f32.mrf.mxu0
  %v138 = vadd.f32 %v55, %v137
  %139 = vmatmul.f32.gmra.mxu0 %v76
  %v140 = vpop.f32.mrf.mxu0
  %v141 = vadd.f32 %v55, %v140
  %142 = vmatmul.f32.gmra.mxu0 %v79
  %v143 = vpop.f32.mrf.mxu0
  %v144 = vadd.f32 %v55, %v143
  %145 = vmatmul.f32.gmra.mxu0 %v82
  %v146 = vpop.f32.mrf.mxu0
  %v147 = vadd.f32 %v55, %v146
  %148 = vmatmul.f32.gmra.mxu0 %v85
  %v149 = vpop.f32.mrf.mxu0
  %v150 = vadd.f32 %v55, %v149
  %151 = vmatmul.f32.gmra.mxu0 %v88
  %v152 = vpop.f32.mrf.mxu0
  %v153 = vadd.f32 %v55, %v152
  %154 = vmatmul.f32.gmra.mxu0 %v91
  %v155 = vpop.f32.mrf.mxu0
  %v156 = vadd.f32 %v55, %v155
  %157 = vmatmul.f32.gmra.mxu0 %v94
  %v158 = vpop.f32.mrf.mxu0
  %v159 = vadd.f32 %v55, %v158
  %160 = vmatmul.f32.gmra.mxu0 %v97
  %v161 = vpop.f32.mrf.mxu0
  %v162 = vadd.f32 %v55, %v161
  %163 = vmatmul.f32.gmra.mxu0 %v100
  %v164 = vpop.f32.mrf.mxu0
  %v165 = vadd.f32 %v55, %v164
  %166 = vmatmul.f32.gmra.mxu0 %v103
  %v167 = vpop.f32.mrf.mxu0
  %v168 = vadd.f32 %v55, %v167
  %169 = vdwg.mxu0
  %v170 = vld [vmem:[%s3] sm:$0xff]
  %v171 = vld [vmem:[%s3 + $0x8] sm:$0xff]
  %v172 = vld [vmem:[%s3 + $0x10] sm:$0xff]
  %v173 = vld [vmem:[%s3 + $0x18] sm:$0xff]
  %v174 = vld [vmem:[%s3 + $0x20] sm:$0xff]
  %v175 = vld [vmem:[%s3 + $0x28] sm:$0xff]
  %v176 = vld [vmem:[%s3 + $0x30] sm:$0xff]
  %v177 = vld [vmem:[%s3 + $0x38] sm:$0xff]
  %v178 = vld [vmem:[%s3 + $0x40] sm:$0xff]
  %v179 = vld [vmem:[%s3 + $0x48] sm:$0xff]
  %v180 = vld [vmem:[%s3 + $0x50] sm:$0xff]
  %v181 = vld [vmem:[%s3 + $0x58] sm:$0xff]
  %v182 = vld [vmem:[%s3 + $0x60] sm:$0xff]
  %v183 = vld [vmem:[%s3 + $0x68] sm:$0xff]
  %v184 = vld [vmem:[%s3 + $0x70] sm:$0xff]
  %v185 = vld [vmem:[%s3 + $0x78] sm:$0xff]
  %v186 = vld [vmem:[%s4 + $0x1] sm:$0x1]
  %v187 = vperm.slane %v186, 0
  %188 = vmatpush.msra.mxu0 %v185
  %189 = vmatpush.msra.mxu0 %v184
  %190 = vmatpush.msra.mxu0 %v183
  %191 = vmatpush.msra.mxu0 %v182
  %192 = vmatpush.msra.mxu0 %v181
  %193 = vmatpush.msra.mxu0 %v180
  %194 = vmatpush.msra.mxu0 %v179
  %195 = vmatpush.msra.mxu0 %v178
  %196 = vmatpush.msra.mxu0 %v177
  %197 = vmatpush.msra.mxu0 %v176
  %198 = vmatpush.msra.mxu0 %v175
  %199 = vmatpush.msra.mxu0 %v174
  %200 = vmatpush.msra.mxu0 %v173
  %201 = vmatpush.msra.mxu0 %v172
  %202 = vmatpush.msra.mxu0 %v171
  %203 = vmatpush.msra.mxu0 %v170
  %204 = vmatmul.f32.gmra.mxu0 %v123
  %v205 = vpop.f32.mrf.mxu0
  %v206 = vadd.f32 %v187, %v205
  %207 = vmatmul.f32.gmra.mxu0 %v126
  %v208 = vpop.f32.mrf.mxu0
  %v209 = vadd.f32 %v187, %v208
  %210 = vmatmul.f32.gmra.mxu0 %v129
  %v211 = vpop.f32.mrf.mxu0
  %v212 = vadd.f32 %v187, %v211
  %213 = vmatmul.f32.gmra.mxu0 %v132
  %v214 = vpop.f32.mrf.mxu0
  %v215 = vadd.f32 %v187, %v214
  %216 = vmatmul.f32.gmra.mxu0 %v135
  %v217 = vpop.f32.mrf.mxu0
  %v218 = vadd.f32 %v187, %v217
  %219 = vmatmul.f32.gmra.mxu0 %v138
  %v220 = vpop.f32.mrf.mxu0
  %v221 = vadd.f32 %v187, %v220
  %222 = vmatmul.f32.gmra.mxu0 %v141
  %v223 = vpop.f32.mrf.mxu0
  %v224 = vadd.f32 %v187, %v223
  %225 = vmatmul.f32.gmra.mxu0 %v144
  %v226 = vpop.f32.mrf.mxu0
  %v227 = vadd.f32 %v187, %v226
  %228 = vmatmul.f32.gmra.mxu0 %v147
  %v229 = vpop.f32.mrf.mxu0
  %v230 = vadd.f32 %v187, %v229
  %231 = vmatmul.f32.gmra.mxu0 %v150
  %v232 = vpop.f32.mrf.mxu0
  %v233 = vadd.f32 %v187, %v232
  %234 = vmatmul.f32.gmra.mxu0 %v153
  %v235 = vpop.f32.mrf.mxu0
  %v236 = vadd.f32 %v187, %v235
  %237 = vmatmul.f32.gmra.mxu0 %v156
  %v238 = vpop.f32.mrf.mxu0
  %v239 = vadd.f32 %v187, %v238
  %240 = vmatmul.f32.gmra.mxu0 %v159
  %v241 = vpop.f32.mrf.mxu0
  %v242 = vadd.f32 %v187, %v241
  %243 = vmatmul.f32.gmra.mxu0 %v162
  %v244 = vpop.f32.mrf.mxu0
  %v245 = vadd.f32 %v187, %v244
  %246 = vmatmul.f32.gmra.mxu0 %v165
  %v247 = vpop.f32.mrf.mxu0
  %v248 = vadd.f32 %v187, %v247
  %249 = vmatmul.f32.gmra.mxu0 %v168
  %v250 = vpop.f32.mrf.mxu0
  %v251 = vadd.f32 %v187, %v250
  %252 = vdwg.mxu0
  %v253 = vtanh.pop %v206
  %v254 = vtanh.pop %v209
  %v255 = vtanh.pop %v212
  %v256 = vtanh.pop %v215
  %v257 = vtanh.pop %v218
  %v258 = vtanh.pop %v221
  %v259 = vtanh.pop %v224
  %v260 = vtanh.pop %v227
  %v261 = vtanh.pop %v230
  %v262 = vtanh.pop %v233
  %v263 = vtanh.pop %v236
  %v264 = vtanh.pop %v239
  %v265 = vtanh.pop %v242
  %v266 = vtanh.pop %v245
  %v267 = vtanh.pop %v248
  %v268 = vtanh.pop %v251
  %s269 = scalar_lea.vmem %s3, 128
  %v270 = vld [vmem:[%s269] sm:$0xff]
  %v271 = vld [vmem:[%s269 + $0x8] sm:$0xff]
  %v272 = vld [vmem:[%s269 + $0x10] sm:$0xff]
  %v273 = vld [vmem:[%s269 + $0x18] sm:$0xff]
  %v274 = vld [vmem:[%s269 + $0x20] sm:$0xff]
  %v275 = vld [vmem:[%s269 + $0x28] sm:$0xff]
  %v276 = vld [vmem:[%s269 + $0x30] sm:$0xff]
  %v277 = vld [vmem:[%s269 + $0x38] sm:$0xff]
  %v278 = vld [vmem:[%s269 + $0x40] sm:$0xff]
  %v279 = vld [vmem:[%s269 + $0x48] sm:$0xff]
  %v280 = vld [vmem:[%s269 + $0x50] sm:$0xff]
  %v281 = vld [vmem:[%s269 + $0x58] sm:$0xff]
  %v282 = vld [vmem:[%s269 + $0x60] sm:$0xff]
  %v283 = vld [vmem:[%s269 + $0x68] sm:$0xff]
  %v284 = vld [vmem:[%s269 + $0x70] sm:$0xff]
  %v285 = vld [vmem:[%s269 + $0x78] sm:$0xff]
  %v286 = vld [vmem:[%s4 + $0x2] sm:$0x1]
  %v287 = vperm.slane %v286, 0
  %288 = vmatpush.msra.mxu0 %v285
  %289 = vmatpush.msra.mxu0 %v284
  %290 = vmatpush.msra.mxu0 %v283
  %291 = vmatpush.msra.mxu0 %v282
  %292 = vmatpush.msra.mxu0 %v281
  %293 = vmatpush.msra.mxu0 %v280
  %294 = vmatpush.msra.mxu0 %v279
  %295 = vmatpush.msra.mxu0 %v278
  %296 = vmatpush.msra.mxu0 %v277
  %297 = vmatpush.msra.mxu0 %v276
  %298 = vmatpush.msra.mxu0 %v275
  %299 = vmatpush.msra.mxu0 %v274
  %300 = vmatpush.msra.mxu0 %v273
  %301 = vmatpush.msra.mxu0 %v272
  %302 = vmatpush.msra.mxu0 %v271
  %303 = vmatpush.msra.mxu0 %v270
  %304 = vmatmul.f32.gmra.mxu0 %v253
  %v305 = vpop.f32.mrf.mxu0
  %v306 = vadd.f32 %v287, %v305
  %307 = vmatmul.f32.gmra.mxu0 %v254
  %v308 = vpop.f32.mrf.mxu0
  %v309 = vadd.f32 %v287, %v308
  %310 = vmatmul.f32.gmra.mxu0 %v255
  %v311 = vpop.f32.mrf.mxu0
  %v312 = vadd.f32 %v287, %v311
  %313 = vmatmul.f32.gmra.mxu0 %v256
  %v314 = vpop.f32.mrf.mxu0
  %v315 = vadd.f32 %v287, %v314
  %316 = vmatmul.f32.gmra.mxu0 %v257
  %v317 = vpop.f32.mrf.mxu0
  %v318 = vadd.f32 %v287, %v317
  %319 = vmatmul.f32.gmra.mxu0 %v258
  %v320 = vpop.f32.mrf.mxu0
  %v321 = vadd.f32 %v287, %v320
  %322 = vmatmul.f32.gmra.mxu0 %v259
  %v323 = vpop.f32.mrf.mxu0
  %v324 = vadd.f32 %v287, %v323
  %325 = vmatmul.f32.gmra.mxu0 %v260
  %v326 = vpop.f32.mrf.mxu0
  %v327 = vadd.f32 %v287, %v326
  %328 = vmatmul.f32.gmra.mxu0 %v261
  %v329 = vpop.f32.mrf.mxu0
  %v330 = vadd.f32 %v287, %v329
  %331 = vmatmul.f32.gmra.mxu0 %v262
  %v332 = vpop.f32.mrf.mxu0
  %v333 = vadd.f32 %v287, %v332
  %334 = vmatmul.f32.gmra.mxu0 %v263
  %v335 = vpop.f32.mrf.mxu0
  %v336 = vadd.f32 %v287, %v335
  %337 = vmatmul.f32.gmra.mxu0 %v264
  %v338 = vpop.f32.mrf.mxu0
  %v339 = vadd.f32 %v287, %v338
  %340 = vmatmul.f32.gmra.mxu0 %v265
  %v341 = vpop.f32.mrf.mxu0
  %v342 = vadd.f32 %v287, %v341
  %343 = vmatmul.f32.gmra.mxu0 %v266
  %v344 = vpop.f32.mrf.mxu0
  %v345 = vadd.f32 %v287, %v344
  %346 = vmatmul.f32.gmra.mxu0 %v267
  %v347 = vpop.f32.mrf.mxu0
  %v348 = vadd.f32 %v287, %v347
  %349 = vmatmul.f32.gmra.mxu0 %v268
  %v350 = vpop.f32.mrf.mxu0
  %v351 = vadd.f32 %v287, %v350
  %352 = vdwg.mxu0
  %v353 = vtanh.pop %v306
  %v354 = vtanh.pop %v309
  %v355 = vtanh.pop %v312
  %v356 = vtanh.pop %v315
  %v357 = vtanh.pop %v318
  %v358 = vtanh.pop %v321
  %v359 = vtanh.pop %v324
  %v360 = vtanh.pop %v327
  %v361 = vtanh.pop %v330
  %v362 = vtanh.pop %v333
  %v363 = vtanh.pop %v336
  %v364 = vtanh.pop %v339
  %v365 = vtanh.pop %v342
  %v366 = vtanh.pop %v345
  %v367 = vtanh.pop %v348
  %v368 = vtanh.pop %v351
  %s369 = scalar_lea.vmem %s3, 256
  %v370 = vld [vmem:[%s369] sm:$0xff]
  %v371 = vld [vmem:[%s369 + $0x8] sm:$0xff]
  %v372 = vld [vmem:[%s369 + $0x10] sm:$0xff]
  %v373 = vld [vmem:[%s369 + $0x18] sm:$0xff]
  %v374 = vld [vmem:[%s369 + $0x20] sm:$0xff]
  %v375 = vld [vmem:[%s369 + $0x28] sm:$0xff]
  %v376 = vld [vmem:[%s369 + $0x30] sm:$0xff]
  %v377 = vld [vmem:[%s369 + $0x38] sm:$0xff]
  %v378 = vld [vmem:[%s369 + $0x40] sm:$0xff]
  %v379 = vld [vmem:[%s369 + $0x48] sm:$0xff]
  %v380 = vld [vmem:[%s369 + $0x50] sm:$0xff]
  %v381 = vld [vmem:[%s369 + $0x58] sm:$0xff]
  %v382 = vld [vmem:[%s369 + $0x60] sm:$0xff]
  %v383 = vld [vmem:[%s369 + $0x68] sm:$0xff]
  %v384 = vld [vmem:[%s369 + $0x70] sm:$0xff]
  %v385 = vld [vmem:[%s369 + $0x78] sm:$0xff]
  %v386 = vld [vmem:[%s4 + $0x3] sm:$0x1]
  %v387 = vperm.slane %v386, 0
  %388 = vmatpush.msra.mxu0 %v385
  %389 = vmatpush.msra.mxu0 %v384
  %390 = vmatpush.msra.mxu0 %v383
  %391 = vmatpush.msra.mxu0 %v382
  %392 = vmatpush.msra.mxu0 %v381
  %393 = vmatpush.msra.mxu0 %v380
  %394 = vmatpush.msra.mxu0 %v379
  %395 = vmatpush.msra.mxu0 %v378
  %396 = vmatpush.msra.mxu0 %v377
  %397 = vmatpush.msra.mxu0 %v376
  %398 = vmatpush.msra.mxu0 %v375
  %399 = vmatpush.msra.mxu0 %v374
  %400 = vmatpush.msra.mxu0 %v373
  %401 = vmatpush.msra.mxu0 %v372
  %402 = vmatpush.msra.mxu0 %v371
  %403 = vmatpush.msra.mxu0 %v370
  %404 = vmatmul.f32.gmra.mxu0 %v353
  %v405 = vpop.f32.mrf.mxu0
  %v406 = vadd.f32 %v387, %v405
  %407 = vmatmul.f32.gmra.mxu0 %v354
  %v408 = vpop.f32.mrf.mxu0
  %v409 = vadd.f32 %v387, %v408
  %410 = vmatmul.f32.gmra.mxu0 %v355
  %v411 = vpop.f32.mrf.mxu0
  %v412 = vadd.f32 %v387, %v411
  %413 = vmatmul.f32.gmra.mxu0 %v356
  %v414 = vpop.f32.mrf.mxu0
  %v415 = vadd.f32 %v387, %v414
  %416 = vmatmul.f32.gmra.mxu0 %v357
  %v417 = vpop.f32.mrf.mxu0
  %v418 = vadd.f32 %v387, %v417
  %419 = vmatmul.f32.gmra.mxu0 %v358
  %v420 = vpop.f32.mrf.mxu0
  %v421 = vadd.f32 %v387, %v420
  %422 = vmatmul.f32.gmra.mxu0 %v359
  %v423 = vpop.f32.mrf.mxu0
  %v424 = vadd.f32 %v387, %v423
  %425 = vmatmul.f32.gmra.mxu0 %v360
  %v426 = vpop.f32.mrf.mxu0
  %v427 = vadd.f32 %v387, %v426
  %428 = vmatmul.f32.gmra.mxu0 %v361
  %v429 = vpop.f32.mrf.mxu0
  %v430 = vadd.f32 %v387, %v429
  %431 = vmatmul.f32.gmra.mxu0 %v362
  %v432 = vpop.f32.mrf.mxu0
  %v433 = vadd.f32 %v387, %v432
  %434 = vmatmul.f32.gmra.mxu0 %v363
  %v435 = vpop.f32.mrf.mxu0
  %v436 = vadd.f32 %v387, %v435
  %437 = vmatmul.f32.gmra.mxu0 %v364
  %v438 = vpop.f32.mrf.mxu0
  %v439 = vadd.f32 %v387, %v438
  %440 = vmatmul.f32.gmra.mxu0 %v365
  %v441 = vpop.f32.mrf.mxu0
  %v442 = vadd.f32 %v387, %v441
  %443 = vmatmul.f32.gmra.mxu0 %v366
  %v444 = vpop.f32.mrf.mxu0
  %v445 = vadd.f32 %v387, %v444
  %446 = vmatmul.f32.gmra.mxu0 %v367
  %v447 = vpop.f32.mrf.mxu0
  %v448 = vadd.f32 %v387, %v447
  %449 = vmatmul.f32.gmra.mxu0 %v368
  %v450 = vpop.f32.mrf.mxu0
  %v451 = vadd.f32 %v387, %v450
  %452 = vdwg.mxu0
  %v453 = vtanh.pop %v406
  %v454 = vtanh.pop %v409
  %v455 = vtanh.pop %v412
  %v456 = vtanh.pop %v415
  %v457 = vtanh.pop %v418
  %v458 = vtanh.pop %v421
  %v459 = vtanh.pop %v424
  %v460 = vtanh.pop %v427
  %v461 = vtanh.pop %v430
  %v462 = vtanh.pop %v433
  %v463 = vtanh.pop %v436
  %v464 = vtanh.pop %v439
  %v465 = vtanh.pop %v442
  %v466 = vtanh.pop %v445
  %v467 = vtanh.pop %v448
  %v468 = vtanh.pop %v451
  %v469 = vld [vmem:[%s5] sm:$0xff]
  %v470 = vld [vmem:[%s5 + $0x8] sm:$0xff]
  %v471 = vld [vmem:[%s5 + $0x10] sm:$0xff]
  %v472 = vld [vmem:[%s5 + $0x18] sm:$0xff]
  %v473 = vld [vmem:[%s5 + $0x20] sm:$0xff]
  %v474 = vld [vmem:[%s5 + $0x28] sm:$0xff]
  %v475 = vld [vmem:[%s5 + $0x30] sm:$0xff]
  %v476 = vld [vmem:[%s5 + $0x38] sm:$0xff]
  %v477 = vld [vmem:[%s5 + $0x40] sm:$0xff]
  %v478 = vld [vmem:[%s5 + $0x48] sm:$0xff]
  %v479 = vld [vmem:[%s5 + $0x50] sm:$0xff]
  %v480 = vld [vmem:[%s5 + $0x58] sm:$0xff]
  %v481 = vld [vmem:[%s5 + $0x60] sm:$0xff]
  %v482 = vld [vmem:[%s5 + $0x68] sm:$0xff]
  %v483 = vld [vmem:[%s5 + $0x70] sm:$0xff]
  %v484 = vld [vmem:[%s5 + $0x78] sm:$0xff]
  %v485 = vld [vmem:[%s6] sm:$0x1]
  %v487 = vperm.slane %v485, 0
  %489 = vmatpush.msra.mxu0 %v484
  %490 = vmatpush.msra.mxu0 %v483
  %491 = vmatpush.msra.mxu0 %v482
  %492 = vmatpush.msra.mxu0 %v481
  %493 = vmatpush.msra.mxu0 %v480
  %494 = vmatpush.msra.mxu0 %v479
  %495 = vmatpush.msra.mxu0 %v478
  %496 = vmatpush.msra.mxu0 %v477
  %497 = vmatpush.msra.mxu0 %v476
  %498 = vmatpush.msra.mxu0 %v475
  %499 = vmatpush.msra.mxu0 %v474
  %500 = vmatpush.msra.mxu0 %v473
  %501 = vmatpush.msra.mxu0 %v472
  %502 = vmatpush.msra.mxu0 %v471
  %503 = vmatpush.msra.mxu0 %v470
  %504 = vmatpush.msra.mxu0 %v469
  %505 = vmatmul.f32.gmra.mxu0 %v453
  %v506 = vpop.f32.mrf.mxu0
  %v507 = vadd.f32 %v487, %v506
  %508 = vmatmul.f32.gmra.mxu0 %v454
  %v509 = vpop.f32.mrf.mxu0
  %v510 = vadd.f32 %v487, %v509
  %511 = vmatmul.f32.gmra.mxu0 %v455
  %v512 = vpop.f32.mrf.mxu0
  %v513 = vadd.f32 %v487, %v512
  %514 = vmatmul.f32.gmra.mxu0 %v456
  %v515 = vpop.f32.mrf.mxu0
  %v516 = vadd.f32 %v487, %v515
  %517 = vmatmul.f32.gmra.mxu0 %v457
  %v518 = vpop.f32.mrf.mxu0
  %v519 = vadd.f32 %v487, %v518
  %520 = vmatmul.f32.gmra.mxu0 %v458
  %v521 = vpop.f32.mrf.mxu0
  %v522 = vadd.f32 %v487, %v521
  %523 = vmatmul.f32.gmra.mxu0 %v459
  %v524 = vpop.f32.mrf.mxu0
  %v525 = vadd.f32 %v487, %v524
  %526 = vmatmul.f32.gmra.mxu0 %v460
  %v527 = vpop.f32.mrf.mxu0
  %v528 = vadd.f32 %v487, %v527
  %529 = vmatmul.f32.gmra.mxu0 %v461
  %v530 = vpop.f32.mrf.mxu0
  %v531 = vadd.f32 %v487, %v530
  %532 = vmatmul.f32.gmra.mxu0 %v462
  %v533 = vpop.f32.mrf.mxu0
  %v534 = vadd.f32 %v487, %v533
  %535 = vmatmul.f32.gmra.mxu0 %v463
  %v536 = vpop.f32.mrf.mxu0
  %v537 = vadd.f32 %v487, %v536
  %538 = vmatmul.f32.gmra.mxu0 %v464
  %v539 = vpop.f32.mrf.mxu0
  %v540 = vadd.f32 %v487, %v539
  %541 = vmatmul.f32.gmra.mxu0 %v465
  %v542 = vpop.f32.mrf.mxu0
  %v543 = vadd.f32 %v487, %v542
  %544 = vmatmul.f32.gmra.mxu0 %v466
  %v545 = vpop.f32.mrf.mxu0
  %v546 = vadd.f32 %v487, %v545
  %547 = vmatmul.f32.gmra.mxu0 %v467
  %v548 = vpop.f32.mrf.mxu0
  %v549 = vadd.f32 %v487, %v548
  %550 = vmatmul.f32.gmra.mxu0 %v468
  %v551 = vpop.f32.mrf.mxu0
  %v552 = vadd.f32 %v487, %v551
  %553 = vdwg.mxu0
  %v554 = vld [vmem:[%s1] sm:$0xff]
  %v555 = vld [vmem:[%s1 + $0x8] sm:$0xff]
  %v556 = vld [vmem:[%s1 + $0x10] sm:$0xff]
  %v557 = vld [vmem:[%s1 + $0x18] sm:$0xff]
  %v558 = vld [vmem:[%s1 + $0x20] sm:$0xff]
  %v559 = vld [vmem:[%s1 + $0x28] sm:$0xff]
  %v560 = vld [vmem:[%s1 + $0x30] sm:$0xff]
  %v561 = vld [vmem:[%s1 + $0x38] sm:$0xff]
  %v562 = vld [vmem:[%s1 + $0x40] sm:$0xff]
  %v563 = vld [vmem:[%s1 + $0x48] sm:$0xff]
  %v564 = vld [vmem:[%s1 + $0x50] sm:$0xff]
  %v565 = vld [vmem:[%s1 + $0x58] sm:$0xff]
  %v566 = vld [vmem:[%s1 + $0x60] sm:$0xff]
  %v567 = vld [vmem:[%s1 + $0x68] sm:$0xff]
  %v568 = vld [vmem:[%s1 + $0x70] sm:$0xff]
  %v569 = vld [vmem:[%s1 + $0x78] sm:$0xff]
  %v570 = vmul.f32 %v554, %v507
  %v571 = vmul.f32 %v555, %v510
  %v572 = vmul.f32 %v556, %v513
  %v573 = vmul.f32 %v557, %v516
  %v574 = vmul.f32 %v558, %v519
  %v575 = vmul.f32 %v559, %v522
  %v576 = vmul.f32 %v560, %v525
  %v577 = vmul.f32 %v561, %v528
  %v578 = vmul.f32 %v562, %v531
  %v579 = vmul.f32 %v563, %v534
  %v580 = vmul.f32 %v564, %v537
  %v581 = vmul.f32 %v565, %v540
  %v582 = vmul.f32 %v566, %v543
  %v583 = vmul.f32 %v567, %v546
  %v584 = vmul.f32 %v568, %v549
  %v585 = vmul.f32 %v569, %v552
  %v586 = vadd.f32 %v554, %v570
  %v587 = vadd.f32 %v555, %v571
  %v588 = vadd.f32 %v556, %v572
  %v589 = vadd.f32 %v557, %v573
  %v590 = vadd.f32 %v558, %v574
  %v591 = vadd.f32 %v559, %v575
  %v592 = vadd.f32 %v560, %v576
  %v593 = vadd.f32 %v561, %v577
  %v594 = vadd.f32 %v562, %v578
  %v595 = vadd.f32 %v563, %v579
  %v596 = vadd.f32 %v564, %v580
  %v597 = vadd.f32 %v565, %v581
  %v598 = vadd.f32 %v566, %v582
  %v599 = vadd.f32 %v567, %v583
  %v600 = vadd.f32 %v568, %v584
  %v601 = vadd.f32 %v569, %v585
  %vm602 = vcmask 15360
  %603 = vst.msk [vmem:[%s7] sm:$0xff] %vm602, %v586
  %604 = vst.msk [vmem:[%s7 + $0x8] sm:$0xff] %vm602, %v587
  %605 = vst.msk [vmem:[%s7 + $0x10] sm:$0xff] %vm602, %v588
  %606 = vst.msk [vmem:[%s7 + $0x18] sm:$0xff] %vm602, %v589
  %607 = vst.msk [vmem:[%s7 + $0x20] sm:$0xff] %vm602, %v590
  %608 = vst.msk [vmem:[%s7 + $0x28] sm:$0xff] %vm602, %v591
  %609 = vst.msk [vmem:[%s7 + $0x30] sm:$0xff] %vm602, %v592
  %610 = vst.msk [vmem:[%s7 + $0x38] sm:$0xff] %vm602, %v593
  %611 = vst.msk [vmem:[%s7 + $0x40] sm:$0xff] %vm602, %v594
  %612 = vst.msk [vmem:[%s7 + $0x48] sm:$0xff] %vm602, %v595
  %613 = vst.msk [vmem:[%s7 + $0x50] sm:$0xff] %vm602, %v596
  %614 = vst.msk [vmem:[%s7 + $0x58] sm:$0xff] %vm602, %v597
  %615 = vst.msk [vmem:[%s7 + $0x60] sm:$0xff] %vm602, %v598
  %616 = vst.msk [vmem:[%s7 + $0x68] sm:$0xff] %vm602, %v599
  %617 = vst.msk [vmem:[%s7 + $0x70] sm:$0xff] %vm602, %v600
  %618 = vst.msk [vmem:[%s7 + $0x78] sm:$0xff] %vm602, %v601
  // Predicated region
  $region30: #{iphi_forward.1} parent=0 // pred_check
    _
  $region31: #{iphi_forward.1} parent=0 // pred_check_branch
    %620 = sbr.rel (0) target = $region33
  $region32: #{iphi_forward.1} parent=0 // pred_region
    _
  $region33: #{iphi_forward.1} parent=0 // pred_fallthru
    _
  // Predicated region
  $region34: #{iphi_forward.1} parent=0 // pred_check
    _
  $region35: #{iphi_forward.1} parent=0 // pred_check_branch
    %622 = sbr.rel (0) target = $region37
  $region36: #{iphi_forward.1} parent=0 // pred_region
    _
  $region37: #{iphi_forward.1} parent=0 // pred_fallthru
    _

</llo_original>
